<compile_context>
chip_gen: v7x
topology: tpu7x:2x2x1
jax: 0.10.0
libtpu: 0.0.40
codegen_flags: <defaults>
</compile_context>

<pallas_src>
import functools

import jax
import jax.numpy as jnp
from jax.experimental import pallas as pl
from jax.experimental.pallas import tpu as pltpu


POSE_DIM, SHAPE_DIM, JOINT_DIM = 48, 10, 63
HEADS_DIM = POSE_DIM + SHAPE_DIM + JOINT_DIM      # 121
HEADS_PAD = 128                                   # lane-dense head store
K1_RAW, K1_PAD = 3 * 3 * 3, 32                    # conv1 K padded 27 -> 32


# ---------------------------------------------------------------------------
# Kernel 1: M-tiled matmul + bias + relu   (encoder conv1 via im2col)
# ---------------------------------------------------------------------------
def _matmul_bias_relu_kernel(x_ref, w_ref, b_ref, o_ref):
    """Y = relu(X @ W + b).  X:(tm,K) bf16, W:(K,N) bf16, b:(1,N) f32."""
    acc = jnp.dot(x_ref[...], w_ref[...], preferred_element_type=jnp.float32)
    o_ref[...] = jnp.maximum(acc + b_ref[...], 0.0).astype(o_ref.dtype)


def pallas_conv1(x, w, b2, out_dtype=jnp.bfloat16, tm=1024):
    """M-tiled matmul.  tm default 1024 per review (sweep up at real sizes);
    at the toy size M=128 it clamps to a single block -> grid=(1,)."""
    M, K = x.shape
    K2, N = w.shape
    assert K == K2 and b2.shape == (1, N)
    tm = min(tm, M)
    assert M % tm == 0, "partial last M-tile not handled; pad M or adjust tm"
    grid_m = M // tm
    return pl.pallas_call(
        _matmul_bias_relu_kernel,
        out_shape=jax.ShapeDtypeStruct((M, N), out_dtype),
        grid=(grid_m,),
        in_specs=[
            pl.BlockSpec((tm, K), lambda i: (i, 0)),
            pl.BlockSpec((K, N), lambda i: (0, 0)),
            pl.BlockSpec((1, N), lambda i: (0, 0)),
        ],
        out_specs=pl.BlockSpec((tm, N), lambda i: (i, 0)),
        compiler_params=pltpu.CompilerParams(
            dimension_semantics=("parallel",)),
    )(x, w, b2)


# ---------------------------------------------------------------------------
# Kernel 2: fused conv2 + global-average-pool + decoder (fc1 + heads)
# ---------------------------------------------------------------------------
def _conv2_gap_decoder_kernel(cols_ref, w2_ref, b2_ref,
                              wfc_ref, bfc_ref, wh_ref, bh_ref,
                              f2_ref, gap_ref, heads_ref, *, batch, hw):
    """cols:(B*HW,K) bf16 -> f2:(B*HW,C2) bf16, gap:(B,C2) f32, heads:(B,NH) f32.

    One 32-row MXU dot for conv2 (no per-batch grid), GAP computed while the
    f32 conv output is still in vregs, fc1 + concatenated lane-dense heads run
    as an epilogue in the same invocation (h never leaves VMEM)."""
    # conv2 matmul, f32 accumulation, bias/ReLU on the accumulator.
    y2 = jnp.dot(cols_ref[...], w2_ref[...], preferred_element_type=jnp.float32)
    y2 = jnp.maximum(y2 + b2_ref[...], 0.0)                  # (B*HW, C2) f32
    f2_ref[...] = y2.astype(f2_ref.dtype)

    # Fused GAP epilogue: per-batch mean over the HW rows (static unroll, B tiny).
    for b in range(batch):
        gap_ref[b:b + 1, :] = jnp.mean(
            y2[b * hw:(b + 1) * hw, :], axis=0, keepdims=True)

    # Fused decoder: read the GAP back from VMEM, cast once to bf16 for the MXU.
    g = gap_ref[...].astype(jnp.bfloat16)                    # (B, C2)
    h = jnp.dot(g, wfc_ref[...], preferred_element_type=jnp.float32)
    h = jnp.maximum(h + bfc_ref[...], 0.0)                   # (B, H) f32
    out = jnp.dot(h.astype(jnp.bfloat16), wh_ref[...],
                  preferred_element_type=jnp.float32)
    heads_ref[...] = (out + bh_ref[...]).astype(heads_ref.dtype)


def pallas_conv2_gap_decoder(cols2, w2, b2, wfc, bfc, wh, bh, *, batch, hw):
    M, K = cols2.shape
    assert M == batch * hw
    K2, C2 = w2.shape
    C2b, H = wfc.shape
    H2, NH = wh.shape
    assert K == K2 and C2 == C2b and H == H2
    assert b2.shape == (1, C2) and bfc.shape == (1, H) and bh.shape == (1, NH)

    kernel = functools.partial(_conv2_gap_decoder_kernel, batch=batch, hw=hw)
    f2, gap, heads = pl.pallas_call(
        kernel,
        out_shape=(jax.ShapeDtypeStruct((M, C2), jnp.bfloat16),
                   jax.ShapeDtypeStruct((batch, C2), jnp.float32),
                   jax.ShapeDtypeStruct((batch, NH), jnp.float32)),
        grid=(1,),
        in_specs=[
            pl.BlockSpec((M, K), lambda i: (0, 0)),
            pl.BlockSpec((K, C2), lambda i: (0, 0)),
            pl.BlockSpec((1, C2), lambda i: (0, 0)),
            pl.BlockSpec((C2, H), lambda i: (0, 0)),
            pl.BlockSpec((1, H), lambda i: (0, 0)),
            pl.BlockSpec((H, NH), lambda i: (0, 0)),
            pl.BlockSpec((1, NH), lambda i: (0, 0)),
        ],
        out_specs=(pl.BlockSpec((M, C2), lambda i: (0, 0)),
                   pl.BlockSpec((batch, C2), lambda i: (0, 0)),
                   pl.BlockSpec((batch, NH), lambda i: (0, 0))),
        compiler_params=pltpu.CompilerParams(
            dimension_semantics=("arbitrary",)),
    )(cols2, w2, b2, wfc, bfc, wh, bh)
    return f2, gap, heads


# ---------------------------------------------------------------------------
# Glue: im2col (layout plumbing only; matmuls are the Pallas hot path)
# ---------------------------------------------------------------------------
def im2col(x_nhwc, ksize=3, stride=2, pad=1):
    x = jnp.pad(x_nhwc, ((0, 0), (pad, pad), (pad, pad), (0, 0)))
    N, H, W, C = x.shape
    out_h = (H - ksize) // stride + 1
    out_w = (W - ksize) // stride + 1
    patches = []
    for dy in range(ksize):
        for dx in range(ksize):
            patches.append(
                x[:, dy:dy + stride * out_h:stride,
                  dx:dx + stride * out_w:stride, :])
    cols = jnp.concatenate(patches, axis=-1)          # (N, oh, ow, k*k*C)
    return cols.reshape(N * out_h * out_w, ksize * ksize * C), (N, out_h, out_w)


# ---------------------------------------------------------------------------
# Deterministic parameter init (bf16 MXU weights, (1,N) f32 biases, conv1 K
# zero-padded 27->32, decoder heads concatenated + padded to lane-dense 128)
# ---------------------------------------------------------------------------
def init_params(key):
    ks = jax.random.split(key, 8)

    def lin(k, fan_in, fan_out):
        scale = 1.0 / jnp.sqrt(jnp.float32(fan_in))
        w = jax.random.uniform(k, (fan_in, fan_out), jnp.float32, -scale, scale)
        b = jnp.zeros((1, fan_out), jnp.float32)
        return w, b

    p = {}
    # encoder: 3 -> 32 -> 64 channels, each 3x3 stride-2
    w, b = lin(ks[0], K1_RAW, 32)
    w = jnp.pad(w, ((0, K1_PAD - K1_RAW), (0, 0)))         # K 27 -> 32 (zeros)
    p["enc_conv1_w"], p["enc_conv1_b"] = w.astype(jnp.bfloat16), b
    w, b = lin(ks[1], 3 * 3 * 32, 64)
    p["enc_conv2_w"], p["enc_conv2_b"] = w.astype(jnp.bfloat16), b
    # decoder fc1
    w, b = lin(ks[2], 64, 128)
    p["dec_fc1_w"], p["dec_fc1_b"] = w.astype(jnp.bfloat16), b
    # decoder heads, concatenated along N and zero-padded to 128 (lane-dense)
    pw, pb = lin(ks[3], 128, POSE_DIM)
    sw, sb = lin(ks[4], 128, SHAPE_DIM)
    jw, jb = lin(ks[5], 128, JOINT_DIM)
    wh = jnp.concatenate([pw, sw, jw], axis=1)             # (128, 121)
    bh = jnp.concatenate([pb, sb, jb], axis=1)             # (1, 121)
    wh = jnp.pad(wh, ((0, 0), (0, HEADS_PAD - HEADS_DIM)))
    bh = jnp.pad(bh, ((0, 0), (0, HEADS_PAD - HEADS_DIM)))
    p["dec_heads_w"], p["dec_heads_b"] = wh.astype(jnp.bfloat16), bh
    # cliff: stored but unused in forward (structural parity with the module)
    w, b = lin(ks[6], 64, 3)
    p["cliff_w"], p["cliff_b"] = w.astype(jnp.bfloat16), b
    return p


# ---------------------------------------------------------------------------
# HandNET_GCN forward
# ---------------------------------------------------------------------------
def handnet_gcn_forward(params, img_nchw):
    # NCHW (PyTorch convention) -> NHWC, cast once to bf16 for the MXU.
    x = jnp.transpose(img_nchw, (0, 2, 3, 1)).astype(jnp.bfloat16)

    # ---- encoder conv1: img_fmaps[0] ----
    cols1, (n, oh1, ow1) = im2col(x, ksize=3, stride=2, pad=1)    # (B*64, 27)
    cols1 = jnp.pad(cols1, ((0, 0), (0, K1_PAD - cols1.shape[1])))  # K -> 32
    f1 = pallas_conv1(cols1, params["enc_conv1_w"], params["enc_conv1_b"])
    f1 = f1.reshape(n, oh1, ow1, -1)                              # (B,8,8,32) bf16

    # TODO(synk): at real resolutions, do conv2 directly in-kernel (halo DMA /
    # per-tap shifted matmuls over VMEM-resident f1) instead of this wrapper
    # im2col, which expands f1 by 9x in HBM and forces a round trip.
    cols2, (n2, oh2, ow2) = im2col(f1, ksize=3, stride=2, pad=1)  # (B*16, 288)

    # ---- fused conv2 + mid_model GAP + decoder (fc1 + heads), one call ----
    f2, global_feature, heads = pallas_conv2_gap_decoder(
        cols2, params["enc_conv2_w"], params["enc_conv2_b"],
        params["dec_fc1_w"], params["dec_fc1_b"],
        params["dec_heads_w"], params["dec_heads_b"],
        batch=n2, hw=oh2 * ow2)
    f2 = f2.reshape(n2, oh2, ow2, -1)                             # (B,4,4,64)

    img_fmaps = [f1, f2]
    fmaps = img_fmaps                                             # passthrough

    pose = heads[:, :POSE_DIM]
    shape = heads[:, POSE_DIM:POSE_DIM + SHAPE_DIM]
    joints = heads[:, POSE_DIM + SHAPE_DIM:HEADS_DIM].reshape(-1, 21, 3)

    result = joints
    paramsDict = {"pose": pose, "shape": shape}
    handDictList = [{"joints": joints}]
    otherInfo = {"global_feature": global_feature, "fmaps": fmaps}
    return result, paramsDict, handDictList, otherInfo


# ---------------------------------------------------------------------------
if __name__ == "__main__":
    key = jax.random.PRNGKey(0)
    pkey, ikey = jax.random.split(key)
    params = init_params(pkey)

    # PyTorch-convention NCHW input image: batch=2, channels=3, 16x16
    img = jax.random.normal(ikey, (2, 3, 16, 16), jnp.float32)

    fwd = jax.jit(functools.partial(handnet_gcn_forward, params))
    result, paramsDict, handDictList, otherInfo = fwd(img)
    jax.block_until_ready(result)
    jax.block_until_ready(paramsDict["pose"])
    jax.block_until_ready(otherInfo["global_feature"])

    assert result.shape == (2, 21, 3)
    assert paramsDict["pose"].shape == (2, 48)
    assert paramsDict["shape"].shape == (2, 10)
    assert handDictList[0]["joints"].shape == (2, 21, 3)
    assert otherInfo["global_feature"].shape == (2, 64)
    assert otherInfo["fmaps"][0].shape == (2, 8, 8, 32)
    assert otherInfo["fmaps"][1].shape == (2, 4, 4, 64)
    print("KERNEL_OK")
</pallas_src>

<mosaic_0001>
module attributes {stable_mosaic.version = 11 : i64} {
  func.func @_matmul_bias_relu_kernel(%arg0: i32, %arg1: memref<128x32xbf16, #tpu.memory_space<vmem>>, %arg2: memref<32x32xbf16, #tpu.memory_space<vmem>>, %arg3: memref<1x32xf32, #tpu.memory_space<vmem>>, %arg4: memref<128x32xbf16, #tpu.memory_space<vmem>>) attributes {dimension_semantics = [#tpu.dimension_semantics<parallel>], iteration_bounds = array<i64: 1>, scalar_prefetch = 0 : i64, scratch_operands = 0 : i64, tpu.core_type = #tpu.core_type<tc>, window_params = [{transform_indices = @transform_0, window_bounds = array<i64: 128, 32>}, {pipeline_mode = #tpu.pipeline_mode<synchronous>, transform_indices = @transform_1, window_bounds = array<i64: 32, 32>}, {pipeline_mode = #tpu.pipeline_mode<synchronous>, transform_indices = @transform_2, window_bounds = array<i64: 1, 32>}, {transform_indices = @transform_3, window_bounds = array<i64: 128, 32>}]} {
    %c0 = arith.constant 0 : index
    %c0_0 = arith.constant 0 : index
    %0 = vector.load %arg1[%c0, %c0_0] : memref<128x32xbf16, #tpu.memory_space<vmem>>, vector<128x32xbf16>
    %c0_1 = arith.constant 0 : index
    %c0_2 = arith.constant 0 : index
    %1 = vector.load %arg2[%c0_1, %c0_2] : memref<32x32xbf16, #tpu.memory_space<vmem>>, vector<32x32xbf16>
    %cst = arith.constant dense<0.000000e+00> : vector<128x32xf32>
    %2 = tpu.matmul %0, %1, %cst {dimension_numbers = #tpu.dot_dimension_numbers<[1], [0], [0], [1], [0, 0, 1, 1], [], []>} : vector<128x32xbf16>, vector<32x32xbf16>, vector<128x32xf32> -> vector<128x32xf32>
    %c0_3 = arith.constant 0 : index
    %c0_4 = arith.constant 0 : index
    %3 = vector.load %arg3[%c0_3, %c0_4] : memref<1x32xf32, #tpu.memory_space<vmem>>, vector<1x32xf32>
    %4 = vector.broadcast %3 : vector<1x32xf32> to vector<128x32xf32>
    %5 = arith.addf %2, %4 : vector<128x32xf32>
    %cst_5 = arith.constant 0.000000e+00 : f32
    %6 = vector.broadcast %cst_5 : f32 to vector<128x32xf32>
    %7 = arith.maximumf %5, %6 : vector<128x32xf32>
    %8 = arith.truncf %7 : vector<128x32xf32> to vector<128x32xbf16>
    %c0_6 = arith.constant 0 : index
    %c0_7 = arith.constant 0 : index
    %9 = vector.load %arg4[%c0_6, %c0_7] : memref<128x32xbf16, #tpu.memory_space<vmem>>, vector<128x32xbf16>
    tpu.vector_store %arg4[%c0_6, %c0_7], %8 {strides = array<i32>} : memref<128x32xbf16, #tpu.memory_space<vmem>>, vector<128x32xbf16>,
    return
  }
  func.func @transform_0(%arg0: i32) -> (i32, i32) {
    %c0_i32 = arith.constant 0 : i32
    %c0_i32_0 = arith.constant 0 : i32
    return %arg0, %c0_i32 : i32, i32
  }
  func.func @transform_1(%arg0: i32) -> (i32, i32) {
    %c0_i32 = arith.constant 0 : i32
    %c0_i32_0 = arith.constant 0 : i32
    %c0_i32_1 = arith.constant 0 : i32
    return %c0_i32, %c0_i32_0 : i32, i32
  }
  func.func @transform_2(%arg0: i32) -> (i32, i32) {
    %c0_i32 = arith.constant 0 : i32
    %c0_i32_0 = arith.constant 0 : i32
    %c0_i32_1 = arith.constant 0 : i32
    return %c0_i32, %c0_i32_0 : i32, i32
  }
  func.func @transform_3(%arg0: i32) -> (i32, i32) {
    %c0_i32 = arith.constant 0 : i32
    %c0_i32_0 = arith.constant 0 : i32
    return %arg0, %c0_i32 : i32, i32
  }
}

module attributes {stable_mosaic.version = 11 : i64} {
  func.func @_conv2_gap_decoder_kernel(%arg0: i32, %arg1: memref<32x288xbf16, #tpu.memory_space<vmem>>, %arg2: memref<288x64xbf16, #tpu.memory_space<vmem>>, %arg3: memref<1x64xf32, #tpu.memory_space<vmem>>, %arg4: memref<64x128xbf16, #tpu.memory_space<vmem>>, %arg5: memref<1x128xf32, #tpu.memory_space<vmem>>, %arg6: memref<128x128xbf16, #tpu.memory_space<vmem>>, %arg7: memref<1x128xf32, #tpu.memory_space<vmem>>, %arg8: memref<32x64xbf16, #tpu.memory_space<vmem>>, %arg9: memref<2x64xf32, #tpu.memory_space<vmem>>, %arg10: memref<2x128xf32, #tpu.memory_space<vmem>>) attributes {dimension_semantics = [#tpu.dimension_semantics<arbitrary>], iteration_bounds = array<i64: 1>, scalar_prefetch = 0 : i64, scratch_operands = 0 : i64, tpu.core_type = #tpu.core_type<tc>, window_params = [{pipeline_mode = #tpu.pipeline_mode<synchronous>, transform_indices = @transform_0, window_bounds = array<i64: 32, 288>}, {pipeline_mode = #tpu.pipeline_mode<synchronous>, transform_indices = @transform_1, window_bounds = array<i64: 288, 64>}, {pipeline_mode = #tpu.pipeline_mode<synchronous>, transform_indices = @transform_2, window_bounds = array<i64: 1, 64>}, {pipeline_mode = #tpu.pipeline_mode<synchronous>, transform_indices = @transform_3, window_bounds = array<i64: 64, 128>}, {pipeline_mode = #tpu.pipeline_mode<synchronous>, transform_indices = @transform_4, window_bounds = array<i64: 1, 128>}, {pipeline_mode = #tpu.pipeline_mode<synchronous>, transform_indices = @transform_5, window_bounds = array<i64: 128, 128>}, {pipeline_mode = #tpu.pipeline_mode<synchronous>, transform_indices = @transform_6, window_bounds = array<i64: 1, 128>}, {pipeline_mode = #tpu.pipeline_mode<synchronous>, transform_indices = @transform_7, window_bounds = array<i64: 32, 64>}, {pipeline_mode = #tpu.pipeline_mode<synchronous>, transform_indices = @transform_8, window_bounds = array<i64: 2, 64>}, {pipeline_mode = #tpu.pipeline_mode<synchronous>, transform_indices = @transform_9, window_bounds = array<i64: 2, 128>}]} {
    %c0 = arith.constant 0 : index
    %c0_0 = arith.constant 0 : index
    %0 = vector.load %arg1[%c0, %c0_0] : memref<32x288xbf16, #tpu.memory_space<vmem>>, vector<32x288xbf16>
    %c0_1 = arith.constant 0 : index
    %c0_2 = arith.constant 0 : index
    %1 = vector.load %arg2[%c0_1, %c0_2] : memref<288x64xbf16, #tpu.memory_space<vmem>>, vector<288x64xbf16>
    %cst = arith.constant dense<0.000000e+00> : vector<32x64xf32>
    %2 = tpu.matmul %0, %1, %cst {dimension_numbers = #tpu.dot_dimension_numbers<[1], [0], [0], [1], [0, 0, 1, 1], [], []>} : vector<32x288xbf16>, vector<288x64xbf16>, vector<32x64xf32> -> vector<32x64xf32>
    %c0_3 = arith.constant 0 : index
    %c0_4 = arith.constant 0 : index
    %3 = vector.load %arg3[%c0_3, %c0_4] : memref<1x64xf32, #tpu.memory_space<vmem>>, vector<1x64xf32>
    %4 = vector.broadcast %3 : vector<1x64xf32> to vector<32x64xf32>
    %5 = arith.addf %2, %4 : vector<32x64xf32>
    %cst_5 = arith.constant 0.000000e+00 : f32
    %6 = vector.broadcast %cst_5 : f32 to vector<32x64xf32>
    %7 = arith.maximumf %5, %6 : vector<32x64xf32>
    %8 = arith.truncf %7 : vector<32x64xf32> to vector<32x64xbf16>
    %c0_6 = arith.constant 0 : index
    %c0_7 = arith.constant 0 : index
    %9 = vector.load %arg8[%c0_6, %c0_7] : memref<32x64xbf16, #tpu.memory_space<vmem>>, vector<32x64xbf16>
    tpu.vector_store %arg8[%c0_6, %c0_7], %8 {strides = array<i32>} : memref<32x64xbf16, #tpu.memory_space<vmem>>, vector<32x64xbf16>,
    %10 = vector.extract_strided_slice %7 {offsets = [0, 0], sizes = [16, 64], strides = [1, 1]} : vector<32x64xf32> to vector<16x64xf32>
    %cst_8 = arith.constant dense<0.000000e+00> : vector<64xf32>
    %11 = vector.multi_reduction <add>, %10, %cst_8 [0] : vector<16x64xf32> to vector<64xf32>
    %12 = vector.shape_cast %11 : vector<64xf32> to vector<1x64xf32>
    %cst_9 = arith.constant 1.600000e+01 : f32
    %13 = vector.broadcast %cst_9 : f32 to vector<1x64xf32>
    %14 = arith.divf %12, %13 : vector<1x64xf32>
    %c0_10 = arith.constant 0 : index
    %c0_11 = arith.constant 0 : index
    %15 = vector.load %arg9[%c0_10, %c0_11] : memref<2x64xf32, #tpu.memory_space<vmem>>, vector<1x64xf32>
    tpu.vector_store %arg9[%c0_10, %c0_11], %14 {strides = array<i32>} : memref<2x64xf32, #tpu.memory_space<vmem>>, vector<1x64xf32>,
    %16 = vector.extract_strided_slice %7 {offsets = [16, 0], sizes = [16, 64], strides = [1, 1]} : vector<32x64xf32> to vector<16x64xf32>
    %cst_12 = arith.constant dense<0.000000e+00> : vector<64xf32>
    %17 = vector.multi_reduction <add>, %16, %cst_12 [0] : vector<16x64xf32> to vector<64xf32>
    %18 = vector.shape_cast %17 : vector<64xf32> to vector<1x64xf32>
    %cst_13 = arith.constant 1.600000e+01 : f32
    %19 = vector.broadcast %cst_13 : f32 to vector<1x64xf32>
    %20 = arith.divf %18, %19 : vector<1x64xf32>
    %c1 = arith.constant 1 : index
    %c0_14 = arith.constant 0 : index
    %21 = vector.load %arg9[%c1, %c0_14] : memref<2x64xf32, #tpu.memory_space<vmem>>, vector<1x64xf32>
    tpu.vector_store %arg9[%c1, %c0_14], %20 {strides = array<i32>} : memref<2x64xf32, #tpu.memory_space<vmem>>, vector<1x64xf32>,
    %c0_15 = arith.constant 0 : index
    %c0_16 = arith.constant 0 : index
    %22 = vector.load %arg9[%c0_15, %c0_16] : memref<2x64xf32, #tpu.memory_space<vmem>>, vector<2x64xf32>
    %23 = arith.truncf %22 : vector<2x64xf32> to vector<2x64xbf16>
    %c0_17 = arith.constant 0 : index
    %c0_18 = arith.constant 0 : index
    %24 = vector.load %arg4[%c0_17, %c0_18] : memref<64x128xbf16, #tpu.memory_space<vmem>>, vector<64x128xbf16>
    %cst_19 = arith.constant dense<0.000000e+00> : vector<2x128xf32>
    %25 = tpu.matmul %23, %24, %cst_19 {dimension_numbers = #tpu.dot_dimension_numbers<[1], [0], [0], [1], [0, 0, 1, 1], [], []>} : vector<2x64xbf16>, vector<64x128xbf16>, vector<2x128xf32> -> vector<2x128xf32>
    %c0_20 = arith.constant 0 : index
    %c0_21 = arith.constant 0 : index
    %26 = vector.load %arg5[%c0_20, %c0_21] : memref<1x128xf32, #tpu.memory_space<vmem>>, vector<1x128xf32>
    %27 = vector.broadcast %26 : vector<1x128xf32> to vector<2x128xf32>
    %28 = arith.addf %25, %27 : vector<2x128xf32>
    %cst_22 = arith.constant 0.000000e+00 : f32
    %29 = vector.broadcast %cst_22 : f32 to vector<2x128xf32>
    %30 = arith.maximumf %28, %29 : vector<2x128xf32>
    %31 = arith.truncf %30 : vector<2x128xf32> to vector<2x128xbf16>
    %c0_23 = arith.constant 0 : index
    %c0_24 = arith.constant 0 : index
    %32 = vector.load %arg6[%c0_23, %c0_24] : memref<128x128xbf16, #tpu.memory_space<vmem>>, vector<128x128xbf16>
    %cst_25 = arith.constant dense<0.000000e+00> : vector<2x128xf32>
    %33 = tpu.matmul %31, %32, %cst_25 {dimension_numbers = #tpu.dot_dimension_numbers<[1], [0], [0], [1], [0, 0, 1, 1], [], []>} : vector<2x128xbf16>, vector<128x128xbf16>, vector<2x128xf32> -> vector<2x128xf32>
    %c0_26 = arith.constant 0 : index
    %c0_27 = arith.constant 0 : index
    %34 = vector.load %arg7[%c0_26, %c0_27] : memref<1x128xf32, #tpu.memory_space<vmem>>, vector<1x128xf32>
    %35 = vector.broadcast %34 : vector<1x128xf32> to vector<2x128xf32>
    %36 = arith.addf %33, %35 : vector<2x128xf32>
    %c0_28 = arith.constant 0 : index
    %c0_29 = arith.constant 0 : index
    %37 = vector.load %arg10[%c0_28, %c0_29] : memref<2x128xf32, #tpu.memory_space<vmem>>, vector<2x128xf32>
    tpu.vector_store %arg10[%c0_28, %c0_29], %36 {strides = array<i32>} : memref<2x128xf32, #tpu.memory_space<vmem>>, vector<2x128xf32>,
    return
  }
  func.func @transform_0(%arg0: i32) -> (i32, i32) {
    %c0_i32 = arith.constant 0 : i32
    %c0_i32_0 = arith.constant 0 : i32
    %c0_i32_1 = arith.constant 0 : i32
    return %c0_i32, %c0_i32_0 : i32, i32
  }
  func.func @transform_1(%arg0: i32) -> (i32, i32) {
    %c0_i32 = arith.constant 0 : i32
    %c0_i32_0 = arith.constant 0 : i32
    %c0_i32_1 = arith.constant 0 : i32
    return %c0_i32, %c0_i32_0 : i32, i32
  }
  func.func @transform_2(%arg0: i32) -> (i32, i32) {
    %c0_i32 = arith.constant 0 : i32
    %c0_i32_0 = arith.constant 0 : i32
    %c0_i32_1 = arith.constant 0 : i32
    return %c0_i32, %c0_i32_0 : i32, i32
  }
  func.func @transform_3(%arg0: i32) -> (i32, i32) {
    %c0_i32 = arith.constant 0 : i32
    %c0_i32_0 = arith.constant 0 : i32
    %c0_i32_1 = arith.constant 0 : i32
    return %c0_i32, %c0_i32_0 : i32, i32
  }
  func.func @transform_4(%arg0: i32) -> (i32, i32) {
    %c0_i32 = arith.constant 0 : i32
    %c0_i32_0 = arith.constant 0 : i32
    %c0_i32_1 = arith.constant 0 : i32
    return %c0_i32, %c0_i32_0 : i32, i32
  }
  func.func @transform_5(%arg0: i32) -> (i32, i32) {
    %c0_i32 = arith.constant 0 : i32
    %c0_i32_0 = arith.constant 0 : i32
    %c0_i32_1 = arith.constant 0 : i32
    return %c0_i32, %c0_i32_0 : i32, i32
  }
  func.func @transform_6(%arg0: i32) -> (i32, i32) {
    %c0_i32 = arith.constant 0 : i32
    %c0_i32_0 = arith.constant 0 : i32
    %c0_i32_1 = arith.constant 0 : i32
    return %c0_i32, %c0_i32_0 : i32, i32
  }
  func.func @transform_7(%arg0: i32) -> (i32, i32) {
    %c0_i32 = arith.constant 0 : i32
    %c0_i32_0 = arith.constant 0 : i32
    %c0_i32_1 = arith.constant 0 : i32
    return %c0_i32, %c0_i32_0 : i32, i32
  }
  func.func @transform_8(%arg0: i32) -> (i32, i32) {
    %c0_i32 = arith.constant 0 : i32
    %c0_i32_0 = arith.constant 0 : i32
    %c0_i32_1 = arith.constant 0 : i32
    return %c0_i32, %c0_i32_0 : i32, i32
  }
  func.func @transform_9(%arg0: i32) -> (i32, i32) {
    %c0_i32 = arith.constant 0 : i32
    %c0_i32_0 = arith.constant 0 : i32
    %c0_i32_1 = arith.constant 0 : i32
    return %c0_i32, %c0_i32_0 : i32, i32
  }
}

</mosaic_0001>

<llo_original>
// kernel: handnet_gcn_forward.2
$region0: #{handnet_gcn_forward.2}
  #allocation0 [shape = 'u32[]', space=smem, size = 0x4, offset = 0x4, fixed_abs, tag = 'smem constant byte address 0x4 - core index']
  #allocation1 [shape = 'u32[144,128]{1,0:T(1,128)}', space=vmem, size = 0x12000, scoped, tag = 'internal scratch']
  %s0 = inlined_call_operand.vmem [shape: bf16[128,32], index: 0, kind: input, shape index: {}]
  %s1 = inlined_call_operand.vmem [shape: bf16[32,32], index: 1, kind: input, shape index: {}]
  %s2 = inlined_call_operand.vmem [shape: f32[1,32], index: 2, kind: input, shape index: {}]
  %s3 = inlined_call_operand.vmem [shape: bf16[128,32], index: 3, kind: output, shape index: {}]
  %s4 = sld [smem:[#allocation0]]
  $region22: #{handnet_gcn_forward.2} parent=0
    _
  %s6 = ssub.s32 1, %s4
  %s7 = scalar_select 0, %s6, %s4
  // Predicated region
  $region2: #{handnet_gcn_forward.2} parent=0 // pred_check
    _
  $region3: #{handnet_gcn_forward.2} parent=0 // pred_check_branch
    %9 = sbr.rel (0) target = $region5
  $region4: #{handnet_gcn_forward.2} parent=0 // pred_region
    _
  $region5: #{handnet_gcn_forward.2} parent=0 // pred_fallthru
    _
  // Predicated region
  $region6: #{handnet_gcn_forward.2} parent=0 // pred_check
    _
  $region7: #{handnet_gcn_forward.2} parent=0 // pred_check_branch
    %11 = sbr.rel (0) target = $region9
  $region8: #{handnet_gcn_forward.2} parent=0 // pred_region
    _
  $region9: #{handnet_gcn_forward.2} parent=0 // pred_fallthru
    _
  // Predicated region
  $region10: #{handnet_gcn_forward.2} parent=0 // pred_check
    _
  $region11: #{handnet_gcn_forward.2} parent=0 // pred_check_branch
    %13 = sbr.rel (0) target = $region13
  $region12: #{handnet_gcn_forward.2} parent=0 // pred_region
    _
  $region13: #{handnet_gcn_forward.2} parent=0 // pred_fallthru
    _
  %v15 = vld [vmem:[%s0] sm:$0xf]
  %v16 = vld [vmem:[%s0 + $0x4] sm:$0xf]
  %v17 = vld [vmem:[%s0 + $0x8] sm:$0xf]
  %v18 = vld [vmem:[%s0 + $0xc] sm:$0xf]
  %v19 = vld [vmem:[%s0 + $0x10] sm:$0xf]
  %v20 = vld [vmem:[%s0 + $0x14] sm:$0xf]
  %v21 = vld [vmem:[%s0 + $0x18] sm:$0xf]
  %v22 = vld [vmem:[%s0 + $0x1c] sm:$0xf]
  %v23 = vld [vmem:[%s0 + $0x20] sm:$0xf]
  %v24 = vld [vmem:[%s0 + $0x24] sm:$0xf]
  %v25 = vld [vmem:[%s0 + $0x28] sm:$0xf]
  %v26 = vld [vmem:[%s0 + $0x2c] sm:$0xf]
  %v27 = vld [vmem:[%s0 + $0x30] sm:$0xf]
  %v28 = vld [vmem:[%s0 + $0x34] sm:$0xf]
  %v29 = vld [vmem:[%s0 + $0x38] sm:$0xf]
  %v30 = vld [vmem:[%s0 + $0x3c] sm:$0xf]
  %v31 = vld [vmem:[%s1] sm:$0xf]
  %v32 = vld [vmem:[%s1 + $0x4] sm:$0xf]
  %v33 = vld [vmem:[%s1 + $0x8] sm:$0xf]
  %v34 = vld [vmem:[%s1 + $0xc] sm:$0xf]
  %v35 = vld [vmem:[%s2] sm:$0x1]
  %v37 = vlaneseq
  %v38 = vshrl.u32 %v37, 7
  %v39 = vsub.s32 0, %v38
  %v40 = vrot.slane %v35, %v39
  %v58 = vunpack.c.l.b16 %v15
  %v59 = vunpack.c.l.b16 %v16
  %v60 = vunpack.c.l.b16 %v17
  %v61 = vunpack.c.l.b16 %v18
  %v62 = vunpack.c.l.b16 %v19
  %v63 = vunpack.c.l.b16 %v20
  %v64 = vunpack.c.l.b16 %v21
  %v65 = vunpack.c.l.b16 %v22
  %v66 = vunpack.c.l.b16 %v23
  %v67 = vunpack.c.l.b16 %v24
  %v68 = vunpack.c.l.b16 %v25
  %v69 = vunpack.c.l.b16 %v26
  %v70 = vunpack.c.l.b16 %v27
  %v71 = vunpack.c.l.b16 %v28
  %v72 = vunpack.c.l.b16 %v29
  %v73 = vunpack.c.l.b16 %v30
  %v74 = vpack.c.b16 %v59, %v58
  %v75 = vpack.c.b16 %v61, %v60
  %v76 = vpack.c.b16 %v63, %v62
  %v77 = vpack.c.b16 %v65, %v64
  %v78 = vpack.c.b16 %v67, %v66
  %v79 = vpack.c.b16 %v69, %v68
  %v80 = vpack.c.b16 %v71, %v70
  %v81 = vpack.c.b16 %v73, %v72
  %v86 = vunpack.c.l.b16 %v31
  %v87 = vunpack.c.l.b16 %v32
  %v88 = vunpack.c.l.b16 %v33
  %v89 = vunpack.c.l.b16 %v34
  %v90 = vpack.c.b16 %v87, %v86
  %v91 = vpack.c.b16 %v89, %v88
  %vm94 = vcmask 261120
  %v96 = vsel %vm94, %v74, 0
  %v99 = vsel %vm94, %v75, 0
  %v102 = vsel %vm94, %v76, 0
  %v105 = vsel %vm94, %v77, 0
  %v108 = vsel %vm94, %v78, 0
  %v111 = vsel %vm94, %v79, 0
  %v114 = vsel %vm94, %v80, 0
  %v117 = vsel %vm94, %v81, 0
  %119 = vmatprep.subr.bf16.mxu0 0
  %120 = vmatpush1.bf16.msra.mxu0 %v90
  %121 = vmatprep.subr.bf16.mxu0 0
  %122 = vmatpush1.bf16.msra.mxu0 %v91
  %123 = vmatprep.subr.bf16.mxu0 0
  %124 = vmatpush1.bf16.msra.mxu0 0
  %125 = vmatprep.subr.bf16.mxu0 0
  %126 = vmatpush1.bf16.msra.mxu0 0
  %127 = vmatprep.subr.bf16.mxu0 0
  %128 = vmatpush1.bf16.msra.mxu0 0
  %129 = vmatprep.subr.bf16.mxu0 0
  %130 = vmatpush1.bf16.msra.mxu0 0
  %131 = vmatprep.subr.bf16.mxu0 0
  %132 = vmatpush1.bf16.msra.mxu0 0
  %133 = vmatprep.subr.bf16.mxu0 0
  %134 = vmatpush1.bf16.msra.mxu0 0
  %135 = vmatprep.subr.bf16.mxu0 0
  %136 = vmatpush1.bf16.msra.mxu0 0
  %137 = vmatprep.subr.bf16.mxu0 0
  %138 = vmatpush1.bf16.msra.mxu0 0
  %139 = vmatprep.subr.bf16.mxu0 0
  %140 = vmatpush1.bf16.msra.mxu0 0
  %141 = vmatprep.subr.bf16.mxu0 0
  %142 = vmatpush1.bf16.msra.mxu0 0
  %143 = vmatprep.subr.bf16.mxu0 0
  %144 = vmatpush1.bf16.msra.mxu0 0
  %145 = vmatprep.subr.bf16.mxu0 0
  %146 = vmatpush1.bf16.msra.mxu0 0
  %147 = vmatprep.subr.bf16.mxu0 0
  %148 = vmatpush1.bf16.msra.mxu0 0
  %149 = vmatprep.subr.bf16.mxu0 0
  %150 = vmatpush1.bf16.msra.mxu0 0
  %151 = vmatprep.mubr.bf16.mxu0 0
  %152 = vmatmul.mubr.bf16.gmra.mrb[0].mxu0 %v96
  %v153 = vpop.f32.mrb[0].mxu0
  %v154 = vadd.f32 %v40, %v153
  %v155 = vpop.f32.mrb[0].mxu0
  %v156 = vpop.f32.mrb[0].mxu0
  %v157 = vadd.f32 %v40, %v156
  %v158 = vpop.f32.mrb[0].mxu0
  %159 = vmatprep.mubr.bf16.mxu0 0
  %160 = vmatmul.mubr.bf16.gmra.mrb[0].mxu0 %v99
  %v161 = vpop.f32.mrb[0].mxu0
  %v162 = vadd.f32 %v40, %v161
  %v163 = vpop.f32.mrb[0].mxu0
  %v164 = vpop.f32.mrb[0].mxu0
  %v165 = vadd.f32 %v40, %v164
  %v166 = vpop.f32.mrb[0].mxu0
  %167 = vmatprep.mubr.bf16.mxu0 0
  %168 = vmatmul.mubr.bf16.gmra.mrb[0].mxu0 %v102
  %v169 = vpop.f32.mrb[0].mxu0
  %v170 = vadd.f32 %v40, %v169
  %v171 = vpop.f32.mrb[0].mxu0
  %v172 = vpop.f32.mrb[0].mxu0
  %v173 = vadd.f32 %v40, %v172
  %v174 = vpop.f32.mrb[0].mxu0
  %175 = vmatprep.mubr.bf16.mxu0 0
  %176 = vmatmul.mubr.bf16.gmra.mrb[0].mxu0 %v105
  %v177 = vpop.f32.mrb[0].mxu0
  %v178 = vadd.f32 %v40, %v177
  %v179 = vpop.f32.mrb[0].mxu0
  %v180 = vpop.f32.mrb[0].mxu0
  %v181 = vadd.f32 %v40, %v180
  %v182 = vpop.f32.mrb[0].mxu0
  %183 = vmatprep.mubr.bf16.mxu0 0
  %184 = vmatmul.mubr.bf16.gmra.mrb[0].mxu0 %v108
  %v185 = vpop.f32.mrb[0].mxu0
  %v186 = vadd.f32 %v40, %v185
  %v187 = vpop.f32.mrb[0].mxu0
  %v188 = vpop.f32.mrb[0].mxu0
  %v189 = vadd.f32 %v40, %v188
  %v190 = vpop.f32.mrb[0].mxu0
  %191 = vmatprep.mubr.bf16.mxu0 0
  %192 = vmatmul.mubr.bf16.gmra.mrb[0].mxu0 %v111
  %v193 = vpop.f32.mrb[0].mxu0
  %v194 = vadd.f32 %v40, %v193
  %v195 = vpop.f32.mrb[0].mxu0
  %v196 = vpop.f32.mrb[0].mxu0
  %v197 = vadd.f32 %v40, %v196
  %v198 = vpop.f32.mrb[0].mxu0
  %199 = vmatprep.mubr.bf16.mxu0 0
  %200 = vmatmul.mubr.bf16.gmra.mrb[0].mxu0 %v114
  %v201 = vpop.f32.mrb[0].mxu0
  %v202 = vadd.f32 %v40, %v201
  %v203 = vpop.f32.mrb[0].mxu0
  %v204 = vpop.f32.mrb[0].mxu0
  %v205 = vadd.f32 %v40, %v204
  %v206 = vpop.f32.mrb[0].mxu0
  %207 = vmatprep.mubr.bf16.mxu0 0
  %208 = vmatmul.mubr.bf16.gmra.mrb[0].mxu0 %v117
  %v209 = vpop.f32.mrb[0].mxu0
  %v210 = vadd.f32 %v40, %v209
  %v211 = vpop.f32.mrb[0].mxu0
  %v212 = vpop.f32.mrb[0].mxu0
  %v213 = vadd.f32 %v40, %v212
  %v214 = vpop.f32.mrb[0].mxu0
  %215 = vdwg.mxu0
  %v216 = vmax.f32 %v154, 0.0
  %v217 = vmax.f32 %v157, 0.0
  %v218 = vmax.f32 %v162, 0.0
  %v219 = vmax.f32 %v165, 0.0
  %v220 = vmax.f32 %v170, 0.0
  %v221 = vmax.f32 %v173, 0.0
  %v222 = vmax.f32 %v178, 0.0
  %v223 = vmax.f32 %v181, 0.0
  %v224 = vmax.f32 %v186, 0.0
  %v225 = vmax.f32 %v189, 0.0
  %v226 = vmax.f32 %v194, 0.0
  %v227 = vmax.f32 %v197, 0.0
  %v228 = vmax.f32 %v202, 0.0
  %v229 = vmax.f32 %v205, 0.0
  %v230 = vmax.f32 %v210, 0.0
  %v231 = vmax.f32 %v213, 0.0
  %v232 = vpack.c.bf16 %v217, %v216
  %v233 = vpack.c.bf16 %v219, %v218
  %v234 = vpack.c.bf16 %v221, %v220
  %v235 = vpack.c.bf16 %v223, %v222
  %v236 = vpack.c.bf16 %v225, %v224
  %v237 = vpack.c.bf16 %v227, %v226
  %v238 = vpack.c.bf16 %v229, %v228
  %v239 = vpack.c.bf16 %v231, %v230
  %v248 = vunpack.c.l.b16 %v232
  %v249 = vunpack.c.h.b16 %v232
  %v250 = vunpack.c.l.b16 %v233
  %v251 = vunpack.c.h.b16 %v233
  %v252 = vunpack.c.l.b16 %v234
  %v253 = vunpack.c.h.b16 %v234
  %v254 = vunpack.c.l.b16 %v235
  %v255 = vunpack.c.h.b16 %v235
  %v256 = vunpack.c.l.b16 %v236
  %v257 = vunpack.c.h.b16 %v236
  %v258 = vunpack.c.l.b16 %v237
  %v259 = vunpack.c.h.b16 %v237
  %v260 = vunpack.c.l.b16 %v238
  %v261 = vunpack.c.h.b16 %v238
  %v262 = vunpack.c.l.b16 %v239
  %v263 = vunpack.c.h.b16 %v239
  %v264 = vpack.c.b16 %v248, %v248
  %v265 = vpack.c.b16 %v249, %v249
  %v266 = vpack.c.b16 %v250, %v250
  %v267 = vpack.c.b16 %v251, %v251
  %v268 = vpack.c.b16 %v252, %v252
  %v269 = vpack.c.b16 %v253, %v253
  %v270 = vpack.c.b16 %v254, %v254
  %v271 = vpack.c.b16 %v255, %v255
  %v272 = vpack.c.b16 %v256, %v256
  %v273 = vpack.c.b16 %v257, %v257
  %v274 = vpack.c.b16 %v258, %v258
  %v275 = vpack.c.b16 %v259, %v259
  %v276 = vpack.c.b16 %v260, %v260
  %v277 = vpack.c.b16 %v261, %v261
  %v278 = vpack.c.b16 %v262, %v262
  %v279 = vpack.c.b16 %v263, %v263
  %vm296 = vcmask 257024
  %297 = vst.msk [vmem:[%s3] sm:$0xf] %vm296, %v264
  %298 = vst.msk [vmem:[%s3 + $0x4] sm:$0xf] %vm296, %v265
  %299 = vst.msk [vmem:[%s3 + $0x8] sm:$0xf] %vm296, %v266
  %300 = vst.msk [vmem:[%s3 + $0xc] sm:$0xf] %vm296, %v267
  %301 = vst.msk [vmem:[%s3 + $0x10] sm:$0xf] %vm296, %v268
  %302 = vst.msk [vmem:[%s3 + $0x14] sm:$0xf] %vm296, %v269
  %303 = vst.msk [vmem:[%s3 + $0x18] sm:$0xf] %vm296, %v270
  %304 = vst.msk [vmem:[%s3 + $0x1c] sm:$0xf] %vm296, %v271
  %305 = vst.msk [vmem:[%s3 + $0x20] sm:$0xf] %vm296, %v272
  %306 = vst.msk [vmem:[%s3 + $0x24] sm:$0xf] %vm296, %v273
  %307 = vst.msk [vmem:[%s3 + $0x28] sm:$0xf] %vm296, %v274
  %308 = vst.msk [vmem:[%s3 + $0x2c] sm:$0xf] %vm296, %v275
  %309 = vst.msk [vmem:[%s3 + $0x30] sm:$0xf] %vm296, %v276
  %310 = vst.msk [vmem:[%s3 + $0x34] sm:$0xf] %vm296, %v277
  %311 = vst.msk [vmem:[%s3 + $0x38] sm:$0xf] %vm296, %v278
  %312 = vst.msk [vmem:[%s3 + $0x3c] sm:$0xf] %vm296, %v279
  // Predicated region
  $region14: #{handnet_gcn_forward.2} parent=0 // pred_check
    _
  $region15: #{handnet_gcn_forward.2} parent=0 // pred_check_branch
    %314 = sbr.rel (0) target = $region17
  $region16: #{handnet_gcn_forward.2} parent=0 // pred_region
    _
  $region17: #{handnet_gcn_forward.2} parent=0 // pred_fallthru
    _
  // Predicated region
  $region18: #{handnet_gcn_forward.2} parent=0 // pred_check
    _
  $region19: #{handnet_gcn_forward.2} parent=0 // pred_check_branch
    %316 = sbr.rel (0) target = $region21
  $region20: #{handnet_gcn_forward.2} parent=0 // pred_region
    _
  $region21: #{handnet_gcn_forward.2} parent=0 // pred_fallthru
    _

// kernel: handnet_gcn_forward.3
$region0: #{handnet_gcn_forward.3}
  #allocation0 [shape = 'u32[]', space=smem, size = 0x4, offset = 0x4, fixed_abs, tag = 'smem constant byte address 0x4 - core index']
  #allocation1 [shape = 'u32[144,128]{1,0:T(1,128)}', space=vmem, size = 0x12000, scoped, tag = 'internal scratch']
  %s0 = inlined_call_operand.vmem [shape: bf16[32,288], index: 0, kind: input, shape index: {}]
  %s1 = inlined_call_operand.vmem [shape: bf16[288,64], index: 1, kind: input, shape index: {}]
  %s2 = inlined_call_operand.vmem [shape: f32[1,64], index: 2, kind: input, shape index: {}]
  %s3 = inlined_call_operand.vmem [shape: bf16[64,128], index: 3, kind: input, shape index: {}]
  %s4 = inlined_call_operand.vmem [shape: f32[1,128], index: 4, kind: input, shape index: {}, may-alias: {4,6}]
  %s5 = inlined_call_operand.vmem [shape: bf16[128,128], index: 5, kind: input, shape index: {}]
  %s6 = inlined_call_operand.vmem [shape: f32[1,128], index: 6, kind: input, shape index: {}, may-alias: {4,6}]
  %s7 = inlined_call_operand.hbm [shape: bf16[32,64], index: 7, kind: output, shape index: {0}]
  %s8 = inlined_call_operand.hbm [shape: f32[2,64], index: 8, kind: output, shape index: {1}]
  %s9 = inlined_call_operand.vmem [shape: f32[2,128], index: 9, kind: output, shape index: {2}]
  %10 = xla_tuple %s7, %s8, %s9
  %s11 = sld [smem:[#allocation0]]
  $region54: #{handnet_gcn_forward.3} parent=0
    _
  %s13 = ssub.s32 1, %s11
  %s14 = scalar_select 0, %s13, %s11
  $region1: #{handnet_gcn_forward.3} parent=0
    #allocation2 [shape = 'u8[8192]{0}', space=vmem, size = 0x2000, scoped, tag = 'output window, operand 0, single buffered']
    #allocation3 [shape = 's32[1]{0}', space=sflag, size = 0x4, scoped, tag = 'scoped memory for handnet_gcn_forward.3']
    #allocation4 [shape = 'u8[1024]{0}', space=vmem, size = 0x400, scoped, tag = 'output window, operand 1, single buffered']
    #allocation5 [shape = 's32[1]{0}', space=sflag, size = 0x4, scoped, tag = 'scoped memory for handnet_gcn_forward.3']
    %15 = vsyncpa [#allocation3], 0
    %16 = vsyncpa [#allocation5], 0
    // Predicated region
    $region2: #{handnet_gcn_forward.3} parent=1 // pred_check
      _
    $region3: #{handnet_gcn_forward.3} parent=1 // pred_check_branch
      %18 = sbr.rel (0) target = $region5
    $region4: #{handnet_gcn_forward.3} parent=1 // pred_region
      _
    $region5: #{handnet_gcn_forward.3} parent=1 // pred_fallthru
      _
    // Predicated region
    $region6: #{handnet_gcn_forward.3} parent=1 // pred_check
      _
    $region7: #{handnet_gcn_forward.3} parent=1 // pred_check_branch
      %20 = sbr.rel (0) target = $region9
    $region8: #{handnet_gcn_forward.3} parent=1 // pred_region
      _
    $region9: #{handnet_gcn_forward.3} parent=1 // pred_fallthru
      _
    // Predicated region
    $region10: #{handnet_gcn_forward.3} parent=1 // pred_check
      _
    $region11: #{handnet_gcn_forward.3} parent=1 // pred_check_branch
      %22 = sbr.rel (0) target = $region13
    $region12: #{handnet_gcn_forward.3} parent=1 // pred_region
      _
    $region13: #{handnet_gcn_forward.3} parent=1 // pred_fallthru
      _
    // Predicated region
    $region14: #{handnet_gcn_forward.3} parent=1 // pred_check
      _
    $region15: #{handnet_gcn_forward.3} parent=1 // pred_check_branch
      %24 = sbr.rel (0) target = $region17
    $region16: #{handnet_gcn_forward.3} parent=1 // pred_region
      _
    $region17: #{handnet_gcn_forward.3} parent=1 // pred_fallthru
      _
    // Predicated region
    $region18: #{handnet_gcn_forward.3} parent=1 // pred_check
      _
    $region19: #{handnet_gcn_forward.3} parent=1 // pred_check_branch
      %26 = sbr.rel (0) target = $region21
    $region20: #{handnet_gcn_forward.3} parent=1 // pred_region
      _
    $region21: #{handnet_gcn_forward.3} parent=1 // pred_fallthru
      _
    // Predicated region
    $region22: #{handnet_gcn_forward.3} parent=1 // pred_check
      _
    $region23: #{handnet_gcn_forward.3} parent=1 // pred_check_branch
      %28 = sbr.rel (0) target = $region25
    $region24: #{handnet_gcn_forward.3} parent=1 // pred_region
      _
    $region25: #{handnet_gcn_forward.3} parent=1 // pred_fallthru
      _
    // Predicated region
    $region26: #{handnet_gcn_forward.3} parent=1 // pred_check
      _
    $region27: #{handnet_gcn_forward.3} parent=1 // pred_check_branch
      %30 = sbr.rel (0) target = $region29
    $region28: #{handnet_gcn_forward.3} parent=1 // pred_region
      _
    $region29: #{handnet_gcn_forward.3} parent=1 // pred_fallthru
      _
    %v32 = vld [vmem:[%s0] sm:$0xff]
    %v33 = vld [vmem:[%s0 + $0x8] sm:$0xf]
    %v34 = vld [vmem:[%s0 + $0xc] sm:$0xff]
    %v35 = vld [vmem:[%s0 + $0x14] sm:$0xf]
    %v36 = vld [vmem:[%s0 + $0x18] sm:$0xff]
    %v37 = vld [vmem:[%s0 + $0x20] sm:$0xf]
    %v38 = vld [vmem:[%s0 + $0x24] sm:$0xff]
    %v39 = vld [vmem:[%s0 + $0x2c] sm:$0xf]
    %v40 = vld [vmem:[%s1] sm:$0xf]
    %v41 = vld [vmem:[%s1 + $0x4] sm:$0xf]
    %v42 = vld [vmem:[%s1 + $0x8] sm:$0xf]
    %v43 = vld [vmem:[%s1 + $0xc] sm:$0xf]
    %v44 = vld [vmem:[%s1 + $0x10] sm:$0xf]
    %v45 = vld [vmem:[%s1 + $0x14] sm:$0xf]
    %v46 = vld [vmem:[%s1 + $0x18] sm:$0xf]
    %v47 = vld [vmem:[%s1 + $0x1c] sm:$0xf]
    %v48 = vld [vmem:[%s1 + $0x20] sm:$0xf]
    %v49 = vld [vmem:[%s1 + $0x24] sm:$0xf]
    %v50 = vld [vmem:[%s1 + $0x28] sm:$0xf]
    %v51 = vld [vmem:[%s1 + $0x2c] sm:$0xf]
    %v52 = vld [vmem:[%s1 + $0x30] sm:$0xf]
    %v53 = vld [vmem:[%s1 + $0x34] sm:$0xf]
    %v54 = vld [vmem:[%s1 + $0x38] sm:$0xf]
    %v55 = vld [vmem:[%s1 + $0x3c] sm:$0xf]
    %v56 = vld [vmem:[%s1 + $0x40] sm:$0xf]
    %v57 = vld [vmem:[%s1 + $0x44] sm:$0xf]
    %v58 = vld [vmem:[%s1 + $0x48] sm:$0xf]
    %v59 = vld [vmem:[%s1 + $0x4c] sm:$0xf]
    %v60 = vld [vmem:[%s1 + $0x50] sm:$0xf]
    %v61 = vld [vmem:[%s1 + $0x54] sm:$0xf]
    %v62 = vld [vmem:[%s1 + $0x58] sm:$0xf]
    %v63 = vld [vmem:[%s1 + $0x5c] sm:$0xf]
    %v64 = vld [vmem:[%s1 + $0x60] sm:$0xf]
    %v65 = vld [vmem:[%s1 + $0x64] sm:$0xf]
    %v66 = vld [vmem:[%s1 + $0x68] sm:$0xf]
    %v67 = vld [vmem:[%s1 + $0x6c] sm:$0xf]
    %v68 = vld [vmem:[%s1 + $0x70] sm:$0xf]
    %v69 = vld [vmem:[%s1 + $0x74] sm:$0xf]
    %v70 = vld [vmem:[%s1 + $0x78] sm:$0xf]
    %v71 = vld [vmem:[%s1 + $0x7c] sm:$0xf]
    %v72 = vld [vmem:[%s1 + $0x80] sm:$0xf]
    %v73 = vld [vmem:[%s1 + $0x84] sm:$0xf]
    %v74 = vld [vmem:[%s1 + $0x88] sm:$0xf]
    %v75 = vld [vmem:[%s1 + $0x8c] sm:$0xf]
    %v76 = vld [vmem:[%s2] sm:$0x1]
    %v78 = vlaneseq
    %v79 = vshrl.u32 %v78, 7
    %v80 = vsub.s32 0, %v79
    %v81 = vrot.slane %v76, %v80
    %v91 = vunpack.c.l.b16 %v32
    %v92 = vunpack.c.h.b16 %v32
    %v93 = vunpack.c.l.b16 %v33
    %v94 = vunpack.c.l.b16 %v34
    %v95 = vunpack.c.h.b16 %v34
    %v96 = vunpack.c.l.b16 %v35
    %v97 = vunpack.c.l.b16 %v36
    %v98 = vunpack.c.h.b16 %v36
    %v99 = vunpack.c.l.b16 %v37
    %v100 = vunpack.c.l.b16 %v38
    %v101 = vunpack.c.h.b16 %v38
    %v102 = vunpack.c.l.b16 %v39
    %v103 = vpack.c.b16 %v94, %v91
    %v104 = vpack.c.b16 %v95, %v92
    %v105 = vpack.c.b16 %v96, %v93
    %v106 = vpack.c.b16 %v100, %v97
    %v107 = vpack.c.b16 %v101, %v98
    %v108 = vpack.c.b16 %v102, %v99
    %v149 = vunpack.c.l.b16 %v40
    %v150 = vunpack.c.l.b16 %v41
    %v151 = vunpack.c.l.b16 %v42
    %v152 = vunpack.c.l.b16 %v43
    %v153 = vunpack.c.l.b16 %v44
    %v154 = vunpack.c.l.b16 %v45
    %v155 = vunpack.c.l.b16 %v46
    %v156 = vunpack.c.l.b16 %v47
    %v157 = vunpack.c.l.b16 %v48
    %v158 = vunpack.c.l.b16 %v49
    %v159 = vunpack.c.l.b16 %v50
    %v160 = vunpack.c.l.b16 %v51
    %v161 = vunpack.c.l.b16 %v52
    %v162 = vunpack.c.l.b16 %v53
    %v163 = vunpack.c.l.b16 %v54
    %v164 = vunpack.c.l.b16 %v55
    %v165 = vunpack.c.l.b16 %v56
    %v166 = vunpack.c.l.b16 %v57
    %v167 = vunpack.c.l.b16 %v58
    %v168 = vunpack.c.l.b16 %v59
    %v169 = vunpack.c.l.b16 %v60
    %v170 = vunpack.c.l.b16 %v61
    %v171 = vunpack.c.l.b16 %v62
    %v172 = vunpack.c.l.b16 %v63
    %v173 = vunpack.c.l.b16 %v64
    %v174 = vunpack.c.l.b16 %v65
    %v175 = vunpack.c.l.b16 %v66
    %v176 = vunpack.c.l.b16 %v67
    %v177 = vunpack.c.l.b16 %v68
    %v178 = vunpack.c.l.b16 %v69
    %v179 = vunpack.c.l.b16 %v70
    %v180 = vunpack.c.l.b16 %v71
    %v181 = vunpack.c.l.b16 %v72
    %v182 = vunpack.c.l.b16 %v73
    %v183 = vunpack.c.l.b16 %v74
    %v184 = vunpack.c.l.b16 %v75
    %v185 = vpack.c.b16 %v150, %v149
    %v186 = vpack.c.b16 %v152, %v151
    %v187 = vpack.c.b16 %v154, %v153
    %v188 = vpack.c.b16 %v156, %v155
    %v189 = vpack.c.b16 %v158, %v157
    %v190 = vpack.c.b16 %v160, %v159
    %v191 = vpack.c.b16 %v162, %v161
    %v192 = vpack.c.b16 %v164, %v163
    %v193 = vpack.c.b16 %v166, %v165
    %v194 = vpack.c.b16 %v168, %v167
    %v195 = vpack.c.b16 %v170, %v169
    %v196 = vpack.c.b16 %v172, %v171
    %v197 = vpack.c.b16 %v174, %v173
    %v198 = vpack.c.b16 %v176, %v175
    %v199 = vpack.c.b16 %v178, %v177
    %v200 = vpack.c.b16 %v180, %v179
    %v201 = vpack.c.b16 %v182, %v181
    %v202 = vpack.c.b16 %v184, %v183
    %vm221 = vcmask 261120
    %v223 = vsel %vm221, %v105, 0
    %v226 = vsel %vm221, %v108, 0
    %228 = vmatprep.subr.bf16.mxu0 0
    %229 = vmatpush1.bf16.msra.mxu0 %v185
    %230 = vmatprep.subr.bf16.mxu0 0
    %231 = vmatpush1.bf16.msra.mxu0 %v186
    %232 = vmatprep.subr.bf16.mxu0 0
    %233 = vmatpush1.bf16.msra.mxu0 %v187
    %234 = vmatprep.subr.bf16.mxu0 0
    %235 = vmatpush1.bf16.msra.mxu0 %v188
    %236 = vmatprep.subr.bf16.mxu0 0
    %237 = vmatpush1.bf16.msra.mxu0 %v189
    %238 = vmatprep.subr.bf16.mxu0 0
    %239 = vmatpush1.bf16.msra.mxu0 %v190
    %240 = vmatprep.subr.bf16.mxu0 0
    %241 = vmatpush1.bf16.msra.mxu0 %v191
    %242 = vmatprep.subr.bf16.mxu0 0
    %243 = vmatpush1.bf16.msra.mxu0 %v192
    %244 = vmatprep.subr.bf16.mxu0 0
    %245 = vmatpush1.bf16.msra.mxu0 %v193
    %246 = vmatprep.subr.bf16.mxu0 0
    %247 = vmatpush1.bf16.msra.mxu0 %v194
    %248 = vmatprep.subr.bf16.mxu0 0
    %249 = vmatpush1.bf16.msra.mxu0 %v195
    %250 = vmatprep.subr.bf16.mxu0 0
    %251 = vmatpush1.bf16.msra.mxu0 %v196
    %252 = vmatprep.subr.bf16.mxu0 0
    %253 = vmatpush1.bf16.msra.mxu0 %v197
    %254 = vmatprep.subr.bf16.mxu0 0
    %255 = vmatpush1.bf16.msra.mxu0 %v198
    %256 = vmatprep.subr.bf16.mxu0 0
    %257 = vmatpush1.bf16.msra.mxu0 %v199
    %258 = vmatprep.subr.bf16.mxu0 0
    %259 = vmatpush1.bf16.msra.mxu0 %v200
    %260 = vmatprep.mubr.bf16.mxu0 %v104
    %261 = vmatmul.mubr.bf16.gmra.mrb[0].mxu0 %v103
    %v262 = vpop.f32.mrb[0].mxu0
    %v263 = vadd.f32 %v81, %v262
    %v264 = vpop.f32.mrb[0].mxu0
    %v265 = vpop.f32.mrb[0].mxu0
    %v266 = vadd.f32 %v81, %v265
    %v267 = vpop.f32.mrb[0].mxu0
    %268 = vmatprep.mubr.bf16.mxu0 %v107
    %269 = vmatmul.mubr.bf16.gmra.mrb[0].mxu0 %v106
    %v270 = vpop.f32.mrb[0].mxu0
    %v271 = vadd.f32 %v81, %v270
    %v272 = vpop.f32.mrb[0].mxu0
    %v273 = vpop.f32.mrb[0].mxu0
    %v274 = vadd.f32 %v81, %v273
    %v275 = vpop.f32.mrb[0].mxu0
    %276 = vdwg.mxu0
    %277 = vmatprep.subr.bf16.mxu0 0
    %278 = vmatpush1.bf16.msra.mxu0 %v201
    %279 = vmatprep.subr.bf16.mxu0 0
    %280 = vmatpush1.bf16.msra.mxu0 %v202
    %281 = vmatprep.subr.bf16.mxu0 0
    %282 = vmatpush1.bf16.msra.mxu0 0
    %283 = vmatprep.subr.bf16.mxu0 0
    %284 = vmatpush1.bf16.msra.mxu0 0
    %285 = vmatprep.subr.bf16.mxu0 0
    %286 = vmatpush1.bf16.msra.mxu0 0
    %287 = vmatprep.subr.bf16.mxu0 0
    %288 = vmatpush1.bf16.msra.mxu0 0
    %289 = vmatprep.subr.bf16.mxu0 0
    %290 = vmatpush1.bf16.msra.mxu0 0
    %291 = vmatprep.subr.bf16.mxu0 0
    %292 = vmatpush1.bf16.msra.mxu0 0
    %293 = vmatprep.subr.bf16.mxu0 0
    %294 = vmatpush1.bf16.msra.mxu0 0
    %295 = vmatprep.subr.bf16.mxu0 0
    %296 = vmatpush1.bf16.msra.mxu0 0
    %297 = vmatprep.subr.bf16.mxu0 0
    %298 = vmatpush1.bf16.msra.mxu0 0
    %299 = vmatprep.subr.bf16.mxu0 0
    %300 = vmatpush1.bf16.msra.mxu0 0
    %301 = vmatprep.subr.bf16.mxu0 0
    %302 = vmatpush1.bf16.msra.mxu0 0
    %303 = vmatprep.subr.bf16.mxu0 0
    %304 = vmatpush1.bf16.msra.mxu0 0
    %305 = vmatprep.subr.bf16.mxu0 0
    %306 = vmatpush1.bf16.msra.mxu0 0
    %307 = vmatprep.subr.bf16.mxu0 0
    %308 = vmatpush1.bf16.msra.mxu0 0
    %309 = vmatprep.mubr.bf16.mxu0 0
    %310 = vmatmul.mubr.bf16.gmra.mrb[0].mxu0 %v223
    %v311 = vpop.f32.mrb[0].mxu0
    %v312 = vadd.f32 %v263, %v311
    %v313 = vpop.f32.mrb[0].mxu0
    %v314 = vpop.f32.mrb[0].mxu0
    %v315 = vadd.f32 %v266, %v314
    %v316 = vpop.f32.mrb[0].mxu0
    %317 = vmatprep.mubr.bf16.mxu0 0
    %318 = vmatmul.mubr.bf16.gmra.mrb[0].mxu0 %v226
    %v319 = vpop.f32.mrb[0].mxu0
    %v320 = vadd.f32 %v271, %v319
    %v321 = vpop.f32.mrb[0].mxu0
    %v322 = vpop.f32.mrb[0].mxu0
    %v323 = vadd.f32 %v274, %v322
    %v324 = vpop.f32.mrb[0].mxu0
    %325 = vdwg.mxu0
    %v326 = vmax.f32 %v312, 0.0
    %v327 = vmax.f32 %v315, 0.0
    %v328 = vmax.f32 %v320, 0.0
    %v329 = vmax.f32 %v323, 0.0
    %v330 = vpack.c.bf16 %v327, %v326
    %v331 = vpack.c.bf16 %v329, %v328
    %v334 = vunpack.c.l.b16 %v330
    %v335 = vunpack.c.h.b16 %v330
    %v336 = vunpack.c.l.b16 %v331
    %v337 = vunpack.c.h.b16 %v331
    %v338 = vpack.c.b16 %v334, %v334
    %v339 = vpack.c.b16 %v335, %v335
    %v340 = vpack.c.b16 %v336, %v336
    %v341 = vpack.c.b16 %v337, %v337
    %vm346 = vcmask 519168
    %347 = vst.msk [vmem:[#allocation2] sm:$0xf] %vm346, %v338
    %348 = vst.msk [vmem:[#allocation2 + $0x4] sm:$0xf] %vm346, %v339
    %349 = vst.msk [vmem:[#allocation2 + $0x8] sm:$0xf] %vm346, %v340
    %350 = vst.msk [vmem:[#allocation2 + $0xc] sm:$0xf] %vm346, %v341
    %vm351 = vcmask 523264
    %v352 = vsel %vm351, %v326, 0.0
    %v353 = vsel %vm351, %v327, 0.0
    %v354 = vadd.f32 %v352, %v353
    %v355 = vrot.slane %v354, 4
    %v356 = vadd.f32 %v354, %v355
    %v357 = vrot.slane %v356, 2
    %v358 = vadd.f32 %v356, %v357
    %v359 = vrot.slane %v358, 1
    %v360 = vadd.f32 %v358, %v359
    %v361 = vrcp.pop 16.0
    %v362 = vmul.f32 %v360, %v361
    %vm363 = vcmask 516096
    %364 = vst.msk [vmem:[#allocation4] sm:$0x1] %vm363, %v362
    %v365 = vsel %vm351, %v328, 0.0
    %v366 = vsel %vm351, %v329, 0.0
    %v367 = vadd.f32 %v365, %v366
    %v368 = vrot.slane %v367, 4
    %v369 = vadd.f32 %v367, %v368
    %v370 = vrot.slane %v369, 2
    %v371 = vadd.f32 %v369, %v370
    %v372 = vrot.slane %v371, 1
    %v373 = vadd.f32 %v371, %v372
    %v374 = vmul.f32 %v373, %v361
    %375 = vst.msk [vmem:[#allocation4 + $0x1] sm:$0x1] %vm363, %v374
    %v376 = vld [vmem:[#allocation4] sm:$0x3]
    %v377 = vpack.c.bf16 %v376, %v376
    %v378 = vld [vmem:[%s3] sm:$0xf]
    %v379 = vld [vmem:[%s3 + $0x4] sm:$0xf]
    %v380 = vld [vmem:[%s3 + $0x8] sm:$0xf]
    %v381 = vld [vmem:[%s3 + $0xc] sm:$0xf]
    %v382 = vld [vmem:[%s3 + $0x10] sm:$0xf]
    %v383 = vld [vmem:[%s3 + $0x14] sm:$0xf]
    %v384 = vld [vmem:[%s3 + $0x18] sm:$0xf]
    %v385 = vld [vmem:[%s3 + $0x1c] sm:$0xf]
    %v386 = vld [vmem:[%s4] sm:$0x1]
    %v388 = vlaneseq
    %v389 = vshrl.u32 %v388, 7
    %v390 = vsub.s32 0, %v389
    %v391 = vrot.slane %v386, %v390
    %v401 = vunpack.c.l.b16 %v378
    %v402 = vunpack.c.l.b16 %v379
    %v403 = vunpack.c.l.b16 %v380
    %v404 = vunpack.c.l.b16 %v381
    %v405 = vunpack.c.l.b16 %v382
    %v406 = vunpack.c.l.b16 %v383
    %v407 = vunpack.c.l.b16 %v384
    %v408 = vunpack.c.l.b16 %v385
    %v409 = vpack.c.b16 %v402, %v401
    %v410 = vpack.c.b16 %v404, %v403
    %v411 = vpack.c.b16 %v406, %v405
    %v412 = vpack.c.b16 %v408, %v407
    %v418 = vsel %vm351, %v377, 0
    %420 = vmatprep.subr.bf16.mxu0 0
    %421 = vmatpush1.bf16.msra.mxu0 %v409
    %422 = vmatprep.subr.bf16.mxu0 0
    %423 = vmatpush1.bf16.msra.mxu0 %v410
    %424 = vmatprep.subr.bf16.mxu0 0
    %425 = vmatpush1.bf16.msra.mxu0 %v411
    %426 = vmatprep.subr.bf16.mxu0 0
    %427 = vmatpush1.bf16.msra.mxu0 %v412
    %428 = vmatprep.subr.bf16.mxu0 0
    %429 = vmatpush1.bf16.msra.mxu0 0
    %430 = vmatprep.subr.bf16.mxu0 0
    %431 = vmatpush1.bf16.msra.mxu0 0
    %432 = vmatprep.subr.bf16.mxu0 0
    %433 = vmatpush1.bf16.msra.mxu0 0
    %434 = vmatprep.subr.bf16.mxu0 0
    %435 = vmatpush1.bf16.msra.mxu0 0
    %436 = vmatprep.subr.bf16.mxu0 0
    %437 = vmatpush1.bf16.msra.mxu0 0
    %438 = vmatprep.subr.bf16.mxu0 0
    %439 = vmatpush1.bf16.msra.mxu0 0
    %440 = vmatprep.subr.bf16.mxu0 0
    %441 = vmatpush1.bf16.msra.mxu0 0
    %442 = vmatprep.subr.bf16.mxu0 0
    %443 = vmatpush1.bf16.msra.mxu0 0
    %444 = vmatprep.subr.bf16.mxu0 0
    %445 = vmatpush1.bf16.msra.mxu0 0
    %446 = vmatprep.subr.bf16.mxu0 0
    %447 = vmatpush1.bf16.msra.mxu0 0
    %448 = vmatprep.subr.bf16.mxu0 0
    %449 = vmatpush1.bf16.msra.mxu0 0
    %450 = vmatprep.subr.bf16.mxu0 0
    %451 = vmatpush1.bf16.msra.mxu0 0
    %452 = vmatprep.mubr.bf16.mxu0 0
    %453 = vmatmul.mubr.bf16.gmra.mrb[0].mxu0 %v418
    %v454 = vpop.f32.mrb[0].mxu0
    %v455 = vadd.f32 %v391, %v454
    %v456 = vpop.f32.mrb[0].mxu0
    %v457 = vpop.f32.mrb[0].mxu0
    %v458 = vpop.f32.mrb[0].mxu0
    %459 = vdwg.mxu0
    %v460 = vmax.f32 %v455, 0.0
    %v461 = vpack.c.bf16 %v460, %v460
    %v462 = vld [vmem:[%s5] sm:$0xf]
    %v463 = vld [vmem:[%s5 + $0x4] sm:$0xf]
    %v464 = vld [vmem:[%s5 + $0x8] sm:$0xf]
    %v465 = vld [vmem:[%s5 + $0xc] sm:$0xf]
    %v466 = vld [vmem:[%s5 + $0x10] sm:$0xf]
    %v467 = vld [vmem:[%s5 + $0x14] sm:$0xf]
    %v468 = vld [vmem:[%s5 + $0x18] sm:$0xf]
    %v469 = vld [vmem:[%s5 + $0x1c] sm:$0xf]
    %v470 = vld [vmem:[%s5 + $0x20] sm:$0xf]
    %v471 = vld [vmem:[%s5 + $0x24] sm:$0xf]
    %v472 = vld [vmem:[%s5 + $0x28] sm:$0xf]
    %v473 = vld [vmem:[%s5 + $0x2c] sm:$0xf]
    %v474 = vld [vmem:[%s5 + $0x30] sm:$0xf]
    %v475 = vld [vmem:[%s5 + $0x34] sm:$0xf]
    %v476 = vld [vmem:[%s5 + $0x38] sm:$0xf]
    %v477 = vld [vmem:[%s5 + $0x3c] sm:$0xf]
    %v478 = vld [vmem:[%s6] sm:$0x1]
    %v480 = vlaneseq
    %v481 = vshrl.u32 %v480, 7
    %v482 = vsub.s32 0, %v481
    %v483 = vrot.slane %v478, %v482
    %v501 = vunpack.c.l.b16 %v462
    %v502 = vunpack.c.l.b16 %v463
    %v503 = vunpack.c.l.b16 %v464
    %v504 = vunpack.c.l.b16 %v465
    %v505 = vunpack.c.l.b16 %v466
    %v506 = vunpack.c.l.b16 %v467
    %v507 = vunpack.c.l.b16 %v468
    %v508 = vunpack.c.l.b16 %v469
    %v509 = vunpack.c.l.b16 %v470
    %v510 = vunpack.c.l.b16 %v471
    %v511 = vunpack.c.l.b16 %v472
    %v512 = vunpack.c.l.b16 %v473
    %v513 = vunpack.c.l.b16 %v474
    %v514 = vunpack.c.l.b16 %v475
    %v515 = vunpack.c.l.b16 %v476
    %v516 = vunpack.c.l.b16 %v477
    %v517 = vpack.c.b16 %v502, %v501
    %v518 = vpack.c.b16 %v504, %v503
    %v519 = vpack.c.b16 %v506, %v505
    %v520 = vpack.c.b16 %v508, %v507
    %v521 = vpack.c.b16 %v510, %v509
    %v522 = vpack.c.b16 %v512, %v511
    %v523 = vpack.c.b16 %v514, %v513
    %v524 = vpack.c.b16 %v516, %v515
    %533 = vmatprep.subr.bf16.mxu0 0
    %534 = vmatpush1.bf16.msra.mxu0 %v517
    %535 = vmatprep.subr.bf16.mxu0 0
    %536 = vmatpush1.bf16.msra.mxu0 %v518
    %537 = vmatprep.subr.bf16.mxu0 0
    %538 = vmatpush1.bf16.msra.mxu0 %v519
    %539 = vmatprep.subr.bf16.mxu0 0
    %540 = vmatpush1.bf16.msra.mxu0 %v520
    %541 = vmatprep.subr.bf16.mxu0 0
    %542 = vmatpush1.bf16.msra.mxu0 %v521
    %543 = vmatprep.subr.bf16.mxu0 0
    %544 = vmatpush1.bf16.msra.mxu0 %v522
    %545 = vmatprep.subr.bf16.mxu0 0
    %546 = vmatpush1.bf16.msra.mxu0 %v523
    %547 = vmatprep.subr.bf16.mxu0 0
    %548 = vmatpush1.bf16.msra.mxu0 %v524
    %549 = vmatprep.subr.bf16.mxu0 0
    %550 = vmatpush1.bf16.msra.mxu0 0
    %551 = vmatprep.subr.bf16.mxu0 0
    %552 = vmatpush1.bf16.msra.mxu0 0
    %553 = vmatprep.subr.bf16.mxu0 0
    %554 = vmatpush1.bf16.msra.mxu0 0
    %555 = vmatprep.subr.bf16.mxu0 0
    %556 = vmatpush1.bf16.msra.mxu0 0
    %557 = vmatprep.subr.bf16.mxu0 0
    %558 = vmatpush1.bf16.msra.mxu0 0
    %559 = vmatprep.subr.bf16.mxu0 0
    %560 = vmatpush1.bf16.msra.mxu0 0
    %561 = vmatprep.subr.bf16.mxu0 0
    %562 = vmatpush1.bf16.msra.mxu0 0
    %563 = vmatprep.subr.bf16.mxu0 0
    %564 = vmatpush1.bf16.msra.mxu0 0
    %565 = vmatprep.mubr.bf16.mxu0 0
    %566 = vmatmul.mubr.bf16.gmra.mrb[0].mxu0 %v461
    %v567 = vpop.f32.mrb[0].mxu0
    %v568 = vadd.f32 %v483, %v567
    %v569 = vpop.f32.mrb[0].mxu0
    %v570 = vpop.f32.mrb[0].mxu0
    %v571 = vpop.f32.mrb[0].mxu0
    %572 = vdwg.mxu0
    %573 = vst [vmem:[%s9] sm:$0x3] %v568
    // Predicated region
    $region30: #{handnet_gcn_forward.3} parent=1 // pred_check
      _
    $region31: #{handnet_gcn_forward.3} parent=1 // pred_check_branch
      %575 = sbr.rel (0) target = $region33
    $region32: #{handnet_gcn_forward.3} parent=1 // pred_region
      %s577 = ssub.s32 256, 256
      %578 = vsyncadd [#allocation3], %s577
      %s579 = sshll.u32 [#allocation2], 4
      %s580 = int_to_ptr.vmem [resolvable:$true] %s579
      %585 = dma.vmem_to_hbm [thread:$0]  %s580, 256, %s7, [#allocation3], 64, 64, 4
    $region33: #{handnet_gcn_forward.3} parent=1 // pred_fallthru
      _
    // Predicated region
    $region34: #{handnet_gcn_forward.3} parent=1 // pred_check
      _
    $region35: #{handnet_gcn_forward.3} parent=1 // pred_check_branch
      %587 = sbr.rel (0) target = $region37
    $region36: #{handnet_gcn_forward.3} parent=1 // pred_region
      %s589 = ssub.s32 32, 32
      %590 = vsyncadd [#allocation5], %s589
      %s592 = sshll.u32 [#allocation4], 4
      %s593 = int_to_ptr.vmem [resolvable:$true] %s592
      %595 = dma.vmem_to_hbm [thread:$0]  %s593, 32, %s8, [#allocation5]
    $region37: #{handnet_gcn_forward.3} parent=1 // pred_fallthru
      _
    // Predicated region
    $region38: #{handnet_gcn_forward.3} parent=1 // pred_check
      _
    $region39: #{handnet_gcn_forward.3} parent=1 // pred_check_branch
      %597 = sbr.rel (0) target = $region41
    $region40: #{handnet_gcn_forward.3} parent=1 // pred_region
      _
    $region41: #{handnet_gcn_forward.3} parent=1 // pred_fallthru
      _
    // Predicated region
    $region42: #{handnet_gcn_forward.3} parent=1 // pred_check
      _
    $region43: #{handnet_gcn_forward.3} parent=1 // pred_check_branch
      %599 = sbr.rel (0) target = $region45
    $region44: #{handnet_gcn_forward.3} parent=1 // pred_region
      %600 = dma.done [#allocation3], 256
    $region45: #{handnet_gcn_forward.3} parent=1 // pred_fallthru
      _
    // Predicated region
    $region46: #{handnet_gcn_forward.3} parent=1 // pred_check
      _
    $region47: #{handnet_gcn_forward.3} parent=1 // pred_check_branch
      %602 = sbr.rel (0) target = $region49
    $region48: #{handnet_gcn_forward.3} parent=1 // pred_region
      %603 = dma.done [#allocation5], 32
    $region49: #{handnet_gcn_forward.3} parent=1 // pred_fallthru
      _
    // Predicated region
    $region50: #{handnet_gcn_forward.3} parent=1 // pred_check
      _
    $region51: #{handnet_gcn_forward.3} parent=1 // pred_check_branch
      %605 = sbr.rel (0) target = $region53
    $region52: #{handnet_gcn_forward.3} parent=1 // pred_region
      _
    $region53: #{handnet_gcn_forward.3} parent=1 // pred_fallthru
      _
    %606 = vsyncpa [#allocation3], 1
    %607 = vsyncpa [#allocation5], 1

</llo_original>
